<compile_context>
chip_gen: v7x
topology: tpu7x:2x2x1
jax: 0.10.0
libtpu: 0.0.40
codegen_flags: <defaults>
</compile_context>

<pallas_src>
import functools

import numpy as np
import jax
import jax.numpy as jnp
from jax.experimental import pallas as pl
from jax.experimental.pallas import tpu as pltpu


# ----------------------------------------------------------------------------
# Pallas kernels
# ----------------------------------------------------------------------------
def _dma_copy_kernel(*refs):
    """Batched HBM->HBM copy.

    refs = (in_0 .. in_{n-1}, out_0 .. out_{n-1}, dma_sems).  All tensor refs
    live in HBM (memory_space=pl.ANY).  Start every per-tensor DMA first so the
    transfers overlap and keep HBM saturated, then wait for all of them.
    """
    n = (len(refs) - 1) // 2
    sems = refs[-1]
    copies = [
        pltpu.make_async_copy(refs[i], refs[n + i], sems.at[i]) for i in range(n)
    ]
    for c in copies:   # issue all DMAs (overlapped)
        c.start()
    for c in copies:   # then wait for all of them
        c.wait()


def _alias_passthrough_kernel(*refs):
    """In-place variant: every output aliases its input (input_output_aliases),
    so the data is already sitting in the output buffers — no DMA is issued and
    the call costs zero HBM traffic.  The single SMEM store only keeps the
    kernel body trivially non-empty."""
    refs[-1][0] = jnp.int32(1)


# ----------------------------------------------------------------------------
# Wrapper: optional device-side materialization of a prediction dict's tensors
# ----------------------------------------------------------------------------
def materialize_on_device(*arrays, in_place=False):
    """Materialize `arrays` on device with ONE pallas_call.

    in_place=False: batched HBM->HBM DMA copy (one overlapped DMA per tensor,
      no VMEM usage, works for any shape/dtype, no (8,128) constraints).
    in_place=True:  outputs alias the inputs via input_output_aliases — invoke
      under a donating jit (donate_argnums) for a true zero-copy, zero-extra-
      allocation materialization.

    post_processing() deliberately does NOT call this: a device->host transfer
    needs no device-side copy.
    """
    n = len(arrays)
    if n == 0:
        return ()

    out_shape = tuple(jax.ShapeDtypeStruct(a.shape, a.dtype) for a in arrays)
    in_specs = [pl.BlockSpec(memory_space=pl.ANY) for _ in range(n)]
    out_specs = tuple(pl.BlockSpec(memory_space=pl.ANY) for _ in range(n))

    if in_place:
        outs = pl.pallas_call(
            _alias_passthrough_kernel,
            out_shape=out_shape,
            in_specs=in_specs,
            out_specs=out_specs,
            scratch_shapes=[pltpu.SMEM((1,), jnp.int32)],
            input_output_aliases={i: i for i in range(n)},
        )(*arrays)
    else:
        outs = pl.pallas_call(
            _dma_copy_kernel,
            out_shape=out_shape,
            in_specs=in_specs,
            out_specs=out_specs,
            scratch_shapes=[pltpu.SemaphoreType.DMA((n,))],
        )(*arrays)

    if not isinstance(outs, (list, tuple)):   # defensive: single-leaf pytree
        outs = (outs,)
    return tuple(outs)


# ----------------------------------------------------------------------------
# JAX port of PredictorBase
# ----------------------------------------------------------------------------
class PredictorBase:
    def __init__(self, cfg):
        self.model_cfg = cfg
        self.training = True
        # register_buffer('global_step', torch.LongTensor(1).zero_())
        # int32 step counter (enable jax x64 if exact LongTensor/int64 parity
        # is required for checkpoint comparison).
        self.global_step = jnp.zeros((1,), dtype=jnp.int32)
        # The base class has no `header` submodule; subclasses define it.
        self.header = None

    @property
    def mode(self):
        return 'TRAIN' if self.training else 'TEST'

    def update_global_step(self):
        # Plain XLA add — a dedicated Pallas launch for a single int32 add is
        # pure dispatch overhead.
        self.global_step = self.global_step + 1

    def forward(self, **kwargs):
        raise NotImplementedError

    def post_processing(self, batch_dict):
        pred_dicts = {}
        ret_dicts = {}
        # .cpu().numpy() equivalent: direct device->host transfer.  No identity
        # device-side copy — it would only double HBM traffic before the D2H
        # transfer that dominates anyway.
        pred_dicts['pred_seg'] = np.asarray(batch_dict['pred_seg'])
        if 'pred_heatmap' in batch_dict:
            pred_dicts['pred_heatmap'] = np.asarray(batch_dict['pred_heatmap'])
        # TODO(synk): self.header.get_prediction(batch_dict) — `header` is only
        # defined by subclasses; no tensor semantics on the base class.
        pred_dicts['pred_traj'] = None
        return pred_dicts, ret_dicts

    def get_training_loss(self):
        # TODO(synk): depends on self.header.get_loss(), undefined on the base class.
        raise NotImplementedError

    # TODO(synk): load_params_from_file / load_params_with_optimizer are
    # checkpoint file I/O + state_dict bookkeeping — no tensor compute to port.


# ----------------------------------------------------------------------------
# Self-test
# ----------------------------------------------------------------------------
if __name__ == "__main__":
    key = jax.random.PRNGKey(0)
    k1, k2, k3 = jax.random.split(key, 3)
    # Small shapes consistent with a segmentation/heatmap prediction dict.
    pred_seg = jax.random.normal(k1, (2, 4, 16, 16), dtype=jnp.float32)
    pred_heatmap = jax.random.normal(k2, (2, 1, 16, 16), dtype=jnp.float32)
    pred_logits = jax.random.normal(k3, (2, 4, 16, 16),
                                    dtype=jnp.float32).astype(jnp.bfloat16)

    model = PredictorBase(cfg={})

    # global_step buffer semantics (plain XLA add, no kernel launch).
    model.update_global_step()
    model.update_global_step()
    jax.block_until_ready(model.global_step)
    assert int(model.global_step[0]) == 2, "global_step increment mismatch"

    # 1) Batched HBM->HBM DMA copy: one dispatch, overlapped per-tensor DMAs,
    #    arbitrary shapes/dtypes, zero VMEM pressure on any TPU generation.
    seg_c, hm_c, lg_c = materialize_on_device(pred_seg, pred_heatmap, pred_logits)
    jax.block_until_ready((seg_c, hm_c, lg_c))
    assert np.array_equal(np.asarray(seg_c), np.asarray(pred_seg))
    assert np.array_equal(np.asarray(hm_c), np.asarray(pred_heatmap))
    assert np.array_equal(np.asarray(lg_c).astype(np.float32),
                          np.asarray(pred_logits).astype(np.float32))

    # 1b) Single-array path (previous-version bug is fixed).
    (seg_single,) = materialize_on_device(pred_seg)
    jax.block_until_ready(seg_single)
    assert np.array_equal(np.asarray(seg_single), np.asarray(pred_seg))

    # 2) Zero-copy materialization: outputs alias the donated inputs
    #    (input_output_aliases wired up under a donating jit).
    seg_host = np.asarray(pred_seg)
    hm_host = np.asarray(pred_heatmap)
    seg_src = jnp.asarray(seg_host)   # fresh, uniquely-owned device buffers
    hm_src = jnp.asarray(hm_host)     # (donated below — not used afterwards)
    inplace_fn = jax.jit(
        functools.partial(materialize_on_device, in_place=True),
        donate_argnums=(0, 1),
    )
    seg_al, hm_al = inplace_fn(seg_src, hm_src)
    jax.block_until_ready((seg_al, hm_al))
    assert np.array_equal(np.asarray(seg_al), seg_host)
    assert np.array_equal(np.asarray(hm_al), hm_host)

    # 3) post_processing: pure device->host transfer, no device-side copy.
    batch_dict = {'pred_seg': pred_seg, 'pred_heatmap': pred_heatmap}
    pred_dicts, ret_dicts = model.post_processing(batch_dict)
    assert np.array_equal(pred_dicts['pred_seg'], np.asarray(pred_seg))
    assert np.array_equal(pred_dicts['pred_heatmap'], np.asarray(pred_heatmap))
    assert pred_dicts['pred_traj'] is None
    assert ret_dicts == {}
    assert model.mode == 'TRAIN'

    print("KERNEL_OK")
</pallas_src>

<mosaic_0001>
module attributes {stable_mosaic.version = 11 : i64} {
  func.func @_dma_copy_kernel(%arg0: memref<2x4x16x16xf32, #tpu.memory_space<any>>, %arg1: memref<2x1x16x16xf32, #tpu.memory_space<any>>, %arg2: memref<2x4x16x16xbf16, #tpu.memory_space<any>>, %arg3: memref<2x4x16x16xf32, #tpu.memory_space<any>>, %arg4: memref<2x1x16x16xf32, #tpu.memory_space<any>>, %arg5: memref<2x4x16x16xbf16, #tpu.memory_space<any>>, %arg6: memref<3x!tpu.dma_semaphore, #tpu.memory_space<semaphore_mem>>) attributes {dimension_semantics = [], scalar_prefetch = 0 : i64, scratch_operands = 1 : i64, tpu.core_type = #tpu.core_type<tc>} {
    %c0_i32 = arith.constant 0 : i32
    %0 = tpu.memref_slice %arg6[%c0_i32] : memref<3x!tpu.dma_semaphore, #tpu.memory_space<semaphore_mem>> -> memref<1x!tpu.dma_semaphore, #tpu.memory_space<semaphore_mem>>
    %1 = tpu.memref_squeeze %0 : memref<1x!tpu.dma_semaphore, #tpu.memory_space<semaphore_mem>> -> memref<!tpu.dma_semaphore, #tpu.memory_space<semaphore_mem>>
    tpu.enqueue_dma source(%arg0 : memref<2x4x16x16xf32, #tpu.memory_space<any>>) target(%arg3 : memref<2x4x16x16xf32, #tpu.memory_space<any>>) target_semaphore(%1 : memref<!tpu.dma_semaphore, #tpu.memory_space<semaphore_mem>>)
    %c1_i32 = arith.constant 1 : i32
    %2 = tpu.memref_slice %arg6[%c1_i32] : memref<3x!tpu.dma_semaphore, #tpu.memory_space<semaphore_mem>> -> memref<1x!tpu.dma_semaphore, #tpu.memory_space<semaphore_mem>>
    %3 = tpu.memref_squeeze %2 : memref<1x!tpu.dma_semaphore, #tpu.memory_space<semaphore_mem>> -> memref<!tpu.dma_semaphore, #tpu.memory_space<semaphore_mem>>
    tpu.enqueue_dma source(%arg1 : memref<2x1x16x16xf32, #tpu.memory_space<any>>) target(%arg4 : memref<2x1x16x16xf32, #tpu.memory_space<any>>) target_semaphore(%3 : memref<!tpu.dma_semaphore, #tpu.memory_space<semaphore_mem>>)
    %c2_i32 = arith.constant 2 : i32
    %4 = tpu.memref_slice %arg6[%c2_i32] : memref<3x!tpu.dma_semaphore, #tpu.memory_space<semaphore_mem>> -> memref<1x!tpu.dma_semaphore, #tpu.memory_space<semaphore_mem>>
    %5 = tpu.memref_squeeze %4 : memref<1x!tpu.dma_semaphore, #tpu.memory_space<semaphore_mem>> -> memref<!tpu.dma_semaphore, #tpu.memory_space<semaphore_mem>>
    tpu.enqueue_dma source(%arg2 : memref<2x4x16x16xbf16, #tpu.memory_space<any>>) target(%arg5 : memref<2x4x16x16xbf16, #tpu.memory_space<any>>) target_semaphore(%5 : memref<!tpu.dma_semaphore, #tpu.memory_space<semaphore_mem>>)
    %c0_i32_0 = arith.constant 0 : i32
    %6 = tpu.memref_slice %arg6[%c0_i32_0] : memref<3x!tpu.dma_semaphore, #tpu.memory_space<semaphore_mem>> -> memref<1x!tpu.dma_semaphore, #tpu.memory_space<semaphore_mem>>
    %7 = tpu.memref_squeeze %6 : memref<1x!tpu.dma_semaphore, #tpu.memory_space<semaphore_mem>> -> memref<!tpu.dma_semaphore, #tpu.memory_space<semaphore_mem>>
    tpu.wait_dma2 semaphore(%7 : memref<!tpu.dma_semaphore, #tpu.memory_space<semaphore_mem>>) src(%arg0 : memref<2x4x16x16xf32, #tpu.memory_space<any>>) dst(%arg3 : memref<2x4x16x16xf32, #tpu.memory_space<any>>)
    %c1_i32_1 = arith.constant 1 : i32
    %8 = tpu.memref_slice %arg6[%c1_i32_1] : memref<3x!tpu.dma_semaphore, #tpu.memory_space<semaphore_mem>> -> memref<1x!tpu.dma_semaphore, #tpu.memory_space<semaphore_mem>>
    %9 = tpu.memref_squeeze %8 : memref<1x!tpu.dma_semaphore, #tpu.memory_space<semaphore_mem>> -> memref<!tpu.dma_semaphore, #tpu.memory_space<semaphore_mem>>
    tpu.wait_dma2 semaphore(%9 : memref<!tpu.dma_semaphore, #tpu.memory_space<semaphore_mem>>) src(%arg1 : memref<2x1x16x16xf32, #tpu.memory_space<any>>) dst(%arg4 : memref<2x1x16x16xf32, #tpu.memory_space<any>>)
    %c2_i32_2 = arith.constant 2 : i32
    %10 = tpu.memref_slice %arg6[%c2_i32_2] : memref<3x!tpu.dma_semaphore, #tpu.memory_space<semaphore_mem>> -> memref<1x!tpu.dma_semaphore, #tpu.memory_space<semaphore_mem>>
    %11 = tpu.memref_squeeze %10 : memref<1x!tpu.dma_semaphore, #tpu.memory_space<semaphore_mem>> -> memref<!tpu.dma_semaphore, #tpu.memory_space<semaphore_mem>>
    tpu.wait_dma2 semaphore(%11 : memref<!tpu.dma_semaphore, #tpu.memory_space<semaphore_mem>>) src(%arg2 : memref<2x4x16x16xbf16, #tpu.memory_space<any>>) dst(%arg5 : memref<2x4x16x16xbf16, #tpu.memory_space<any>>)
    return
  }
}

</mosaic_0001>

<llo_original>
// kernel: tpu_custom_call.1
$region0: #{tpu_custom_call.1}
  #allocation0 [shape = 'u32[]', space=smem, size = 0x4, offset = 0x4, fixed_abs, tag = 'smem constant byte address 0x4 - core index']
  #allocation1 [shape = 'u32[144,128]{1,0:T(1,128)}', space=vmem, size = 0x12000, scoped, tag = 'internal scratch']
  #allocation2 [shape = 's32[3]{0}', space=sflag, size = 0xc, scoped, tag = 'scratch operand']
  #allocation3 [shape = 's32[]', space=sflag, size = 0x4, offset = 0, fixed_abs, tag = 'sflag constant byte address 0x0 - dummy sync flag']
  #allocation4 [shape = 'u32[0]{0}', space=smem, size = 0, offset = 0, fixed_abs, tag = 'smem constant byte address 0x0 - null']
  #allocation5 [shape = 's32[]', space=sflag, size = 0x4, offset = 0, fixed_abs, tag = 'sflag constant byte address 0x0 - dummy sync flag']
  #allocation6 [shape = 'u32[0]{0}', space=smem, size = 0, offset = 0, fixed_abs, tag = 'smem constant byte address 0x0 - null']
  #allocation7 [shape = 's32[]', space=sflag, size = 0x4, offset = 0, fixed_abs, tag = 'sflag constant byte address 0x0 - dummy sync flag']
  #allocation8 [shape = 'u32[0]{0}', space=smem, size = 0, offset = 0, fixed_abs, tag = 'smem constant byte address 0x0 - null']
  %s0 = inlined_call_operand.hbm [shape: f32[2,4,16,16], index: 0, kind: input, shape index: {}]
  %s1 = inlined_call_operand.hbm [shape: f32[2,1,16,16], index: 1, kind: input, shape index: {}]
  %s2 = inlined_call_operand.hbm [shape: bf16[2,4,16,16], index: 2, kind: input, shape index: {}]
  %s3 = inlined_call_operand.hbm [shape: f32[2,4,16,16], index: 3, kind: output, shape index: {0}]
  %s4 = inlined_call_operand.hbm [shape: f32[2,1,16,16], index: 4, kind: output, shape index: {1}]
  %s5 = inlined_call_operand.hbm [shape: bf16[2,4,16,16], index: 5, kind: output, shape index: {2}]
  %6 = xla_tuple %s3, %s4, %s5
  %s7 = sld [smem:[#allocation0]]
  $region2: #{tpu_custom_call.1} parent=0
    _
  %s9 = ssub.s32 1, %s7
  %s10 = scalar_select 0, %s9, %s7
  %s12 = sshll.u32 1, 14
  %s13 = sxor.u32 4294967295, %s12
  %s16 = sshll.u32 3, 24
  %s17 = sxor.u32 4294967295, %s16
  %s18 = sand.u32 0, %s17
  %s20 = sor.u32 %s18, 0
  %23 = dma.general %s0, 2048, %s3, [#allocation2], [#allocation3], [#allocation4], %s20, 0
  %s24 = scalar_lea.sflag [#allocation2], 1
  %s26 = sshll.u32 1, 14
  %s27 = sxor.u32 4294967295, %s26
  %s30 = sshll.u32 3, 24
  %s31 = sxor.u32 4294967295, %s30
  %s32 = sand.u32 0, %s31
  %s34 = sor.u32 %s32, 0
  %37 = dma.general %s1, 512, %s4, %s24, [#allocation5], [#allocation6], %s34, 0
  %s38 = scalar_lea.sflag [#allocation2], 2
  %s40 = sshll.u32 1, 14
  %s41 = sxor.u32 4294967295, %s40
  %s44 = sshll.u32 3, 24
  %s45 = sxor.u32 4294967295, %s44
  %s46 = sand.u32 0, %s45
  %s48 = sor.u32 %s46, 0
  %51 = dma.general %s2, 1024, %s5, %s38, [#allocation7], [#allocation8], %s48, 0
  %s52 = smul.u32 2, 4
  %s53 = smul.u32 %s52, 16
  %s54 = smul.u32 %s53, 1
  %s55 = sshll.u32 %s54, 4
  %56 = dma.done [#allocation2], %s55
  %s57 = smul.u32 2, 1
  %s58 = smul.u32 %s57, 16
  %s59 = smul.u32 %s58, 1
  %s60 = sshll.u32 %s59, 4
  %61 = dma.done %s24, %s60
  %s62 = smul.u32 4, 2
  %s63 = smul.u32 %s62, 4
  %s64 = smul.u32 %s63, 2
  %s65 = smul.u32 %s64, 1
  %s66 = sshll.u32 %s65, 4
  %67 = dma.done %s38, %s66
  %68 = vsyncmov [#allocation2]
  %s69 = vpop.sfrf %68
  %p70 = scmp.eq.s32.totalorder %s69, 0
  %p71 = pneg %p70
  %73 = shalt.err (%p71)
  %s74 = scalar_lea.sflag [#allocation2], 1
  %75 = vsyncmov %s74
  %s76 = vpop.sfrf %75
  %p77 = scmp.eq.s32.totalorder %s76, 0
  %p78 = pneg %p77
  %80 = shalt.err (%p78)
  %s81 = scalar_lea.sflag [#allocation2], 2
  %82 = vsyncmov %s81
  %s83 = vpop.sfrf %82
  %p84 = scmp.eq.s32.totalorder %s83, 0
  %p85 = pneg %p84
  %87 = shalt.err (%p85)

</llo_original>
